<compile_context>
chip_gen: v5e
topology: v5e:2x2
jax: 0.10.0
libtpu: 0.0.40
codegen_flags: <defaults>
</compile_context>

<pallas_src>
import numpy as np
import jax
import jax.numpy as jnp
from jax import lax
from jax.experimental import pallas as pl
from jax.experimental.pallas import tpu as pltpu

F32 = jnp.float32


# ----------------------------------------------------------------------------
# helpers
# ----------------------------------------------------------------------------
def _round_up(x, m):
    return ((x + m - 1) // m) * m


def _pad2(t, rows, cols):
    r, c = t.shape
    if r == rows and c == cols:
        return t
    return jnp.pad(t, ((0, rows - r), (0, cols - c)))


def _log_sigmoid(x):
    # numerically stable log(sigmoid(x))
    return -(jnp.maximum(-x, 0.0) + jnp.log(1.0 + jnp.exp(-jnp.abs(x))))


# ----------------------------------------------------------------------------
# Kernel 1: tiled dense equivalent of torch.sparse.mm(A, X) [+ Y]
#           (accumulates directly into the resident f32 output block)
# ----------------------------------------------------------------------------
def _spmm_kernel(a_ref, x_ref, o_ref):
    @pl.when(pl.program_id(2) == 0)
    def _():
        o_ref[...] = jnp.zeros_like(o_ref)

    o_ref[...] += jnp.dot(a_ref[...], x_ref[...],
                          preferred_element_type=jnp.float32)


def _spmm_add_kernel(a_ref, x_ref, y_ref, o_ref):
    @pl.when(pl.program_id(2) == 0)
    def _():
        o_ref[...] = y_ref[...].astype(jnp.float32)

    o_ref[...] += jnp.dot(a_ref[...], x_ref[...],
                          preferred_element_type=jnp.float32)


def prepare_adjacency(a, *, tm=512, tk=1024, dtype=None):
    """Pad (and optionally cast) the adjacency ONCE at parameter setup.

    dtype=jnp.bfloat16 halves adjacency HBM bytes (spmm is memory-bound on
    v5e/v6e); accumulation stays f32 inside the kernel either way."""
    M, K = a.shape
    tm = min(tm, _round_up(M, 8))
    tk = min(tk, _round_up(K, 128))
    a_pad = _pad2(a, _round_up(M, tm), _round_up(K, tk))
    if dtype is not None:
        a_pad = a_pad.astype(dtype)
    return {"a": a_pad, "shape": (M, K), "tiles": (tm, tk)}


def spmm(adj, x, y=None, *, tn=256):
    """Tiled, pipelined A @ X (+ Y) with f32 accumulation.

    `adj` must come from prepare_adjacency (pre-padded / pre-cast)."""
    a_pad = adj["a"]
    M, K = adj["shape"]
    tm, tk = adj["tiles"]
    Mp, Kp = a_pad.shape
    N = x.shape[1]
    tn = min(tn, _round_up(N, 128))          # lane-dense output stores
    Np = _round_up(N, tn)
    x_p = _pad2(x, Kp, Np).astype(a_pad.dtype)

    a_spec = pl.BlockSpec((tm, tk), lambda i, j, k: (i, k))
    x_spec = pl.BlockSpec((tk, tn), lambda i, j, k: (k, j))
    o_spec = pl.BlockSpec((tm, tn), lambda i, j, k: (i, j))
    common = dict(
        out_shape=jax.ShapeDtypeStruct((Mp, Np), F32),
        grid=(Mp // tm, Np // tn, Kp // tk),
        out_specs=o_spec,
        compiler_params=pltpu.CompilerParams(
            dimension_semantics=("parallel", "parallel", "arbitrary")),
    )
    if y is None:
        out = pl.pallas_call(_spmm_kernel, in_specs=[a_spec, x_spec],
                             **common)(a_pad, x_p)
    else:
        y_p = _pad2(y, Mp, Np)
        out = pl.pallas_call(_spmm_add_kernel,
                             in_specs=[a_spec, x_spec, o_spec],
                             **common)(a_pad, x_p, y_p)
    return out[:M, :N]


# ----------------------------------------------------------------------------
# GCN propagation (fused RHS: A and A.T are each read only twice per forward)
# ----------------------------------------------------------------------------
def gcn_propagate(ui_adj, iu_adj, users_embedding, items_embedding, noise_item):
    f = items_embedding.shape[1]

    # pass 1 on A: A @ [items | noise]   (one adjacency read for both columns)
    out1 = spmm(ui_adj, jnp.concatenate([items_embedding, noise_item], axis=-1))
    g1_u = out1[:, :f] + users_embedding
    delta_u = out1[:, f:]

    # pass 1 on A.T
    g1_i = spmm(iu_adj, users_embedding, items_embedding)

    # pass 2 on A
    g2_u = spmm(ui_adj, g1_i, g1_u)

    # pass 2 on A.T: A.T @ [g1_u | delta_u]
    out2 = spmm(iu_adj, jnp.concatenate([g1_u, delta_u], axis=-1))
    g2_i = out2[:, :f] + g1_i
    delta_i2 = out2[:, f:]

    # NOTE: the torch reference also computes gcn3_{users,items}_embedding but
    # never uses them in the concatenated output -> dead matmuls dropped.
    gcn_users = jnp.concatenate([users_embedding, g1_u, g2_u], axis=-1)
    gcn_items = jnp.concatenate([items_embedding, g1_i, g2_i], axis=-1)

    # item-side output of gcn_layer(users, items + noise) by linearity of A@X:
    noise_items = jnp.concatenate(
        [items_embedding + noise_item,
         g1_i + noise_item,
         g2_i + noise_item + delta_i2], axis=-1)
    # TODO(synk): on v5e a single stored adjacency + swapped index_map could
    # replace the materialized item_user_matrix (halves adjacency HBM footprint).
    return gcn_users, gcn_items, noise_items


# ----------------------------------------------------------------------------
# Kernel 2: fake_pos — per-row max cosine similarity of e1 against all of e2.
# e1/e2 are pre-normalized and e2 pre-transposed outside the (i,j) loop; the
# tail mask only runs on the last j block; running max lives in the out block.
# ----------------------------------------------------------------------------
def _cosmax_kernel(n2_ref, e1_ref, e2t_ref, o_ref):
    j = pl.program_id(1)
    last = pl.num_programs(1) - 1

    @pl.when(j == 0)
    def _():
        o_ref[...] = jnp.full(o_ref.shape, -jnp.inf, dtype=jnp.float32)

    cos = jnp.dot(e1_ref[...], e2t_ref[...],
                  preferred_element_type=jnp.float32)

    @pl.when(j != last)
    def _():
        o_ref[...] = jnp.maximum(o_ref[...],
                                 jnp.max(cos, axis=-1, keepdims=True))

    @pl.when(j == last)
    def _():
        col = j * cos.shape[1] + lax.broadcasted_iota(jnp.int32, cos.shape, 1)
        masked = jnp.where(col < n2_ref[0], cos, -jnp.inf)
        o_ref[...] = jnp.maximum(o_ref[...],
                                 jnp.max(masked, axis=-1, keepdims=True))


def fake_pos(embedding1, embedding2, similarity):
    n1, d = embedding1.shape
    n2 = embedding2.shape[0]
    if n1 == 0 or n2 == 0:
        return embedding1[:0]

    # normalize once (outside the O(i*j) kernel loop); torch clamps each norm
    # to eps=1e-8, here eps is added under rsqrt — numerically negligible.
    e1n = embedding1 * lax.rsqrt(
        jnp.sum(embedding1 * embedding1, axis=-1, keepdims=True) + 1e-12)
    e2n = embedding2 * lax.rsqrt(
        jnp.sum(embedding2 * embedding2, axis=-1, keepdims=True) + 1e-12)
    e2t = jnp.transpose(e2n)                     # (d, n2)

    t1 = min(256, _round_up(n1, 8))
    t2 = min(256, _round_up(n2, 128))            # 256 keeps the cos block in vregs
    n1p, n2p = _round_up(n1, t1), _round_up(n2, t2)
    cnt = jnp.array([n2], dtype=jnp.int32)

    max_sim = pl.pallas_call(
        _cosmax_kernel,
        out_shape=jax.ShapeDtypeStruct((n1p, 1), F32),
        grid_spec=pltpu.PrefetchScalarGridSpec(
            num_scalar_prefetch=1,
            grid=(n1p // t1, n2p // t2),
            in_specs=[pl.BlockSpec((t1, d), lambda i, j, c: (i, 0)),
                      pl.BlockSpec((d, t2), lambda i, j, c: (0, j))],
            out_specs=pl.BlockSpec((t1, 1), lambda i, j, c: (i, 0)),
        ),
        compiler_params=pltpu.CompilerParams(
            dimension_semantics=("parallel", "arbitrary")),
    )(cnt, _pad2(e1n, n1p, d), _pad2(e2t, d, n2p))[:n1, 0]

    # TODO(synk): dynamic-shape filtering (torch masked indexing) needs a host
    # sync in this eager port; bucket/pad to fixed sizes for a jitted loop.
    keep = np.nonzero(np.asarray(max_sim < similarity))[0]
    if keep.size == 0:
        return embedding1[:0]
    return jnp.take(embedding1, jnp.asarray(keep, dtype=jnp.int32), axis=0)


# ----------------------------------------------------------------------------
# Kernel 3: Generator MLP forward (nn.Sequential of 6 Linears)
#   192 -> 384 -> 192 -> 96(->128 pad) -> 192 -> 192 -> 192(->256 pad),
#   LeakyReLU(0.2) after the first 4.  Rows are gridded; weights stay resident.
# ----------------------------------------------------------------------------
def _generator_kernel(x_ref, w1, b1, w2, b2, w3, b3, w4, b4, w5, b5, w6, b6,
                      o_ref):
    def lrelu(v):
        return jnp.maximum(v, 0.2 * v)

    def lin(h, w, b):
        return jnp.dot(h, w[...], preferred_element_type=jnp.float32) + b[...]

    h = lrelu(lin(x_ref[...], w1, b1))
    h = lrelu(lin(h, w2, b2))
    h = lrelu(lin(h, w3, b3))
    h = lrelu(lin(h, w4, b4))
    h = lin(h, w5, b5)
    o_ref[...] = lin(h, w6, b6)
    # TODO(synk): Dropout(p=0.3) layers omitted (deterministic / eval-mode fwd).


def generator_forward(gen_params, x):
    (w1, b1), (w2, b2), (w3, b3), (w4, b4), (w5, b5), (w6, b6) = gen_params
    # pad the 96-wide hidden layer to 128 lanes (zero padding -> identical math)
    hp = _round_up(w3.shape[1], 128)
    w3p = _pad2(w3, w3.shape[0], hp)
    b3p = _pad2(b3, 1, hp)
    w4p = _pad2(w4, hp, w4.shape[1])
    # pad the 192-wide output to 256 lanes for unmasked lane-dense stores
    dout = w6.shape[1]
    dop = _round_up(dout, 128)
    w6p = _pad2(w6, w6.shape[0], dop)
    b6p = _pad2(b6, 1, dop)

    rows, din = x.shape
    tm = min(128, _round_up(rows, 8))
    rp = _round_up(rows, tm)
    xp = _pad2(x, rp, din)

    weights = [w1, b1, w2, b2, w3p, b3p, w4p, b4, w5, b5, w6p, b6p]
    w_specs = [pl.BlockSpec(t.shape, lambda i: (0, 0)) for t in weights]

    out = pl.pallas_call(
        _generator_kernel,
        out_shape=jax.ShapeDtypeStruct((rp, dop), F32),
        grid=(rp // tm,),
        in_specs=[pl.BlockSpec((tm, din), lambda i: (i, 0))] + w_specs,
        out_specs=pl.BlockSpec((tm, dop), lambda i: (i, 0)),
        compiler_params=pltpu.CompilerParams(
            dimension_semantics=("parallel",)),
    )(xp, *weights)
    return out[:rows, :dout]


# ----------------------------------------------------------------------------
# Kernel 4: fused BPR + L2 reductions
# ----------------------------------------------------------------------------
def _fused_batch_losses_kernel(cnt_ref, u_ref, p_ref, n_ref, j_ref,
                               o_ls, o_u2, o_p2, o_j2,
                               a_ls, a_u2, a_p2, a_j2):
    step = pl.program_id(0)

    @pl.when(step == 0)
    def _():
        a_ls[...] = jnp.zeros_like(a_ls)
        a_u2[...] = jnp.zeros_like(a_u2)
        a_p2[...] = jnp.zeros_like(a_p2)
        a_j2[...] = jnp.zeros_like(a_j2)

    u = u_ref[...]
    p = p_ref[...]
    n = n_ref[...]
    jj = j_ref[...]
    pred_pos = jnp.sum(u * p, axis=-1, keepdims=True)
    pred_neg = jnp.sum(u * n, axis=-1, keepdims=True)
    row = step * u.shape[0] + lax.broadcasted_iota(jnp.int32, pred_pos.shape, 0)
    valid = (row < cnt_ref[0]).astype(jnp.float32)
    a_ls[...] += valid * _log_sigmoid(pred_pos - pred_neg)
    a_u2[...] += valid * jnp.sum(u * u, axis=-1, keepdims=True)
    a_p2[...] += valid * jnp.sum(p * p, axis=-1, keepdims=True)
    a_j2[...] += valid * jnp.sum(jj * jj, axis=-1, keepdims=True)

    @pl.when(step == pl.num_programs(0) - 1)
    def _():
        o_ls[...] = jnp.sum(a_ls[...], axis=0, keepdims=True)
        o_u2[...] = jnp.sum(a_u2[...], axis=0, keepdims=True)
        o_p2[...] = jnp.sum(a_p2[...], axis=0, keepdims=True)
        o_j2[...] = jnp.sum(a_j2[...], axis=0, keepdims=True)


def fused_batch_losses(u_emb, pos_emb, neg_emb, j_emb):
    rows, feat = u_emb.shape
    tm = min(512, _round_up(rows, 8))
    rp = _round_up(rows, tm)
    cnt = jnp.array([rows], dtype=jnp.int32)
    pad = lambda t: _pad2(t, rp, feat)
    in_spec = pl.BlockSpec((tm, feat), lambda i, c: (i, 0))
    out_spec = pl.BlockSpec((1, 1), lambda i, c: (0, 0))
    scalar = jax.ShapeDtypeStruct((1, 1), F32)
    ls, u2, p2, j2 = pl.pallas_call(
        _fused_batch_losses_kernel,
        out_shape=(scalar, scalar, scalar, scalar),
        grid_spec=pltpu.PrefetchScalarGridSpec(
            num_scalar_prefetch=1,
            grid=(rp // tm,),
            in_specs=[in_spec] * 4,
            out_specs=(out_spec, out_spec, out_spec, out_spec),
            scratch_shapes=[pltpu.VMEM((tm, 1), jnp.float32)] * 4,
        ),
        compiler_params=pltpu.CompilerParams(
            dimension_semantics=("arbitrary",)),
    )(cnt, pad(u_emb), pad(pos_emb), pad(neg_emb), pad(j_emb))
    inv = 1.0 / rows
    loss = -ls[0, 0] * inv
    l2_mean = (u2[0, 0] + p2[0, 0] + j2[0, 0]) * inv
    return loss, l2_mean


def _fused_group_losses_kernel(cnt_ref, u_ref, p_ref, n_ref,
                               o_ls, o_p2, a_ls, a_p2):
    step = pl.program_id(0)

    @pl.when(step == 0)
    def _():
        a_ls[...] = jnp.zeros_like(a_ls)
        a_p2[...] = jnp.zeros_like(a_p2)

    u = u_ref[...]
    p = p_ref[...]
    n = n_ref[...]
    pred_pos = jnp.sum(u * p, axis=-1, keepdims=True)
    pred_neg = jnp.sum(u * n, axis=-1, keepdims=True)
    row = step * u.shape[0] + lax.broadcasted_iota(jnp.int32, pred_pos.shape, 0)
    valid = (row < cnt_ref[0]).astype(jnp.float32)
    a_ls[...] += valid * _log_sigmoid(pred_pos - pred_neg)
    a_p2[...] += valid * jnp.sum(p * p, axis=-1, keepdims=True)

    @pl.when(step == pl.num_programs(0) - 1)
    def _():
        o_ls[...] = jnp.sum(a_ls[...], axis=0, keepdims=True)
        o_p2[...] = jnp.sum(a_p2[...], axis=0, keepdims=True)


def fused_group_losses(u_emb, pos_emb, neg_emb):
    rows, feat = u_emb.shape
    tm = min(512, _round_up(rows, 8))
    rp = _round_up(rows, tm)
    cnt = jnp.array([rows], dtype=jnp.int32)
    pad = lambda t: _pad2(t, rp, feat)
    in_spec = pl.BlockSpec((tm, feat), lambda i, c: (i, 0))
    out_spec = pl.BlockSpec((1, 1), lambda i, c: (0, 0))
    scalar = jax.ShapeDtypeStruct((1, 1), F32)
    ls, p2 = pl.pallas_call(
        _fused_group_losses_kernel,
        out_shape=(scalar, scalar),
        grid_spec=pltpu.PrefetchScalarGridSpec(
            num_scalar_prefetch=1,
            grid=(rp // tm,),
            in_specs=[in_spec] * 3,
            out_specs=(out_spec, out_spec),
            scratch_shapes=[pltpu.VMEM((tm, 1), jnp.float32)] * 2,
        ),
        compiler_params=pltpu.CompilerParams(
            dimension_semantics=("arbitrary",)),
    )(cnt, pad(u_emb), pad(pos_emb), pad(neg_emb))
    inv = 1.0 / rows
    return -ls[0, 0] * inv, p2[0, 0] * inv


# ----------------------------------------------------------------------------
# noise() helper (plain glue; avg_len == 1 as in the torch code)
# ----------------------------------------------------------------------------
def noise_fn(male_noise_i_emb, female_noise_i_emb, factor_num):
    avg_len = 1
    male_len = male_noise_i_emb.shape[0]
    female_len = female_noise_i_emb.shape[0]

    male_end_idx = male_len % avg_len + avg_len
    male_mean = male_noise_i_emb[:-male_end_idx].reshape(-1, avg_len, factor_num * 3)
    male_mean = jnp.mean(male_mean, axis=1)
    male_noise_len = male_mean.shape[0]
    if male_noise_len > female_len:
        female_like = male_mean[:female_len]
    else:
        expand_len = int(female_len / male_noise_len) + 1
        female_like = jnp.tile(male_mean, (expand_len, 1))[:female_len]

    female_end_idx = female_len % avg_len + avg_len
    female_mean = female_noise_i_emb[:-female_end_idx].reshape(-1, avg_len, factor_num * 3)
    female_mean = jnp.mean(female_mean, axis=1)
    female_noise_len = female_mean.shape[0]
    if female_noise_len > male_len:
        male_like = female_mean[:male_len]
    else:
        expand_len = int(male_len / female_noise_len) + 1
        male_like = jnp.tile(female_mean, (expand_len, 1))[:male_len]

    return male_like, female_like


# ----------------------------------------------------------------------------
# GCN forward (mirrors GCN.forward)
# ----------------------------------------------------------------------------
def gcn_forward(params, u_batch, i_batch, j_batch, *, b, similarity, factor_num):
    users_embedding = params["embed_user"]
    items_embedding = params["embed_item"]
    users_features = params["users_features"]  # numpy int array [user_num]

    user_emb, item_emb, noise_emb = gcn_propagate(
        params["ui_adj"], params["iu_adj"],
        users_embedding, items_embedding, params["noise_item"])

    u_np = np.asarray(u_batch)
    i_np = np.asarray(i_batch)
    j_np = np.asarray(j_batch)

    gender = users_features[u_np].reshape(-1)
    male_gender = gender.astype(bool)
    female_gender = (1 - gender).astype(bool)

    u_emb = jnp.take(user_emb, u_batch, axis=0)
    i_emb = jnp.take(item_emb, i_batch, axis=0)
    j_emb = jnp.take(item_emb, j_batch, axis=0)
    noise_i_emb2 = jnp.take(noise_emb, i_batch, axis=0)

    len_noise = int(i_emb.shape[0] * b)
    add_emb = jnp.concatenate([i_emb[:-len_noise], noise_i_emb2[-len_noise:]], axis=0)
    noise_j_emb2 = jnp.take(noise_emb, j_batch, axis=0)
    len_noise = int(j_emb.shape[0] * b)
    add_emb_j = jnp.concatenate([noise_j_emb2[-len_noise:], j_emb[:-len_noise]], axis=0)

    male_i_batch = jnp.asarray(i_np[male_gender])
    female_i_batch = jnp.asarray(i_np[female_gender])
    male_noise_i_emb = jnp.take(noise_emb, male_i_batch, axis=0)
    female_noise_i_emb = jnp.take(noise_emb, female_i_batch, axis=0)
    male_i_emb = jnp.take(item_emb, male_i_batch, axis=0)
    female_i_emb = jnp.take(item_emb, female_i_batch, axis=0)
    male_j_batch = jnp.asarray(j_np[male_gender])
    female_j_batch = jnp.asarray(j_np[female_gender])
    male_j_emb = jnp.take(item_emb, male_j_batch, axis=0)
    female_j_emb = jnp.take(item_emb, female_j_batch, axis=0)
    male_u_batch = jnp.asarray(u_np[male_gender])
    female_u_batch = jnp.asarray(u_np[female_gender])
    male_u_emb = jnp.take(user_emb, male_u_batch, axis=0)
    female_u_emb = jnp.take(user_emb, female_u_batch, axis=0)

    female_like_emb = fake_pos(male_i_emb, female_i_emb, similarity)
    male_like_emb = fake_pos(female_i_emb, male_i_emb, similarity)

    # TODO(synk): the torch forward trains the male/female GAN (100 Adam epochs)
    # and calls torch.save inside forward; these side effects are skipped — only
    # the generator forward passes used by the loss are reproduced.
    male_gan_emb = None
    female_gan_emb = None
    if male_like_emb.shape[0] != 0:
        male_gan_emb = generator_forward(params["male_generator"], male_like_emb)
    if female_like_emb.shape[0] != 0:
        female_gan_emb = generator_forward(params["female_generator"], female_like_emb)

    len_male_add = int(male_i_emb.shape[0] * b)
    len_female_add = int(female_i_emb.shape[0] * b)
    male_noise_emb, female_noise_emb = noise_fn(
        male_noise_i_emb, female_noise_i_emb, factor_num)

    if male_like_emb.shape[0] == 0:
        add_male_emb_i = male_noise_emb
    elif len_male_add > male_gan_emb.shape[0]:
        len_gan_add = int(male_gan_emb.shape[0])
        add_male_emb_i = jnp.concatenate([male_i_emb[:-len_gan_add], male_gan_emb], 0)
    else:
        add_male_emb_i = jnp.concatenate(
            [male_i_emb[:-len_male_add], male_gan_emb[0:len_male_add]], 0)

    if female_like_emb.shape[0] == 0:
        add_female_emb_i = female_noise_emb
    elif len_female_add > female_gan_emb.shape[0]:
        len_gan_add = int(female_gan_emb.shape[0])
        add_female_emb_i = jnp.concatenate(
            [female_i_emb[:-len_gan_add], female_gan_emb], 0)
    else:
        add_female_emb_i = jnp.concatenate(
            [female_i_emb[:-len_female_add], female_gan_emb[0:len_female_add]], 0)

    # ----- fused loss reductions -----
    loss_add, l2_batch = fused_batch_losses(u_emb, add_emb, add_emb_j, j_emb)
    l2_regulization = 0.01 * l2_batch

    loss_fake_male, l2_male = fused_group_losses(male_u_emb, add_male_emb_i, male_j_emb)
    loss_fake_female, l2_female = fused_group_losses(
        female_u_emb, add_female_emb_i, female_j_emb)
    loss_fake = loss_fake_male + loss_fake_female
    l2_regulization2 = 0.01 * l2_male + 0.01 * l2_female

    loss_task = 1.0 * loss_add + l2_regulization
    loss_add_item = loss_fake + l2_regulization2
    return [loss_task, l2_regulization, loss_add_item]


# ----------------------------------------------------------------------------
# Deterministic parameter construction
# ----------------------------------------------------------------------------
def make_generator_params(key, embed_dim):
    dims = [embed_dim, embed_dim * 2, embed_dim, embed_dim // 2,
            embed_dim, embed_dim, embed_dim]
    params = []
    keys = jax.random.split(key, len(dims) - 1)
    for k, din, dout in zip(keys, dims[:-1], dims[1:]):
        kw, kb = jax.random.split(k)
        w = jax.random.normal(kw, (din, dout), F32) * (1.0 / np.sqrt(din))
        bias = jax.random.normal(kb, (1, dout), F32) * 0.01
        params.append((w, bias))
    return params


if __name__ == "__main__":
    user_num, item_num, factor_num = 32, 48, 64
    batch = 16
    b = 0.5
    similarity = 0.5

    key = jax.random.PRNGKey(0)
    k = jax.random.split(key, 10)

    embed_user = 0.01 * jax.random.normal(k[0], (user_num, factor_num), F32)
    embed_item = 0.01 * jax.random.normal(k[1], (item_num, factor_num), F32)
    noise_item = 0.01 * jax.random.normal(k[2], (item_num, factor_num), F32)
    # dense stand-in for the normalized sparse adjacency
    user_item_matrix = jax.random.uniform(k[3], (user_num, item_num), F32) / item_num
    item_user_matrix = jnp.transpose(user_item_matrix)
    users_features = (np.arange(user_num) % 2).astype(np.int32)  # gender 0/1

    # adjacency padded (and optionally cast) ONCE here, not per spmm call.
    # dtype=jnp.bfloat16 is recommended on v5e/v6e (memory-bound spmm);
    # kept f32 here for exact parity in this small test.
    adjacency_dtype = None
    params = {
        "embed_user": embed_user,
        "embed_item": embed_item,
        "noise_item": noise_item,
        "ui_adj": prepare_adjacency(user_item_matrix, dtype=adjacency_dtype),
        "iu_adj": prepare_adjacency(item_user_matrix, dtype=adjacency_dtype),
        "users_features": users_features,
        "male_generator": make_generator_params(k[4], factor_num * 3),
        "female_generator": make_generator_params(k[5], factor_num * 3),
    }

    # deterministic batch with both genders present (>= 2 each)
    u_batch = jnp.asarray(np.arange(batch) % user_num, dtype=jnp.int32)
    i_batch = jax.random.randint(k[6], (batch,), 0, item_num, dtype=jnp.int32)
    j_batch = jax.random.randint(k[7], (batch,), 0, item_num, dtype=jnp.int32)

    all_loss = gcn_forward(
        params, u_batch, i_batch, j_batch,
        b=b, similarity=similarity, factor_num=factor_num)
    all_loss = [jax.block_until_ready(x) for x in all_loss]
    assert all(np.isfinite(np.asarray(x)) for x in all_loss)
    print("KERNEL_OK")
</pallas_src>

<mosaic_0001>
module attributes {stable_mosaic.version = 11 : i64} {
  func.func @_spmm_kernel(%arg0: i32, %arg1: i32, %arg2: i32, %arg3: memref<32x128xf32, #tpu.memory_space<vmem>>, %arg4: memref<128x128xf32, #tpu.memory_space<vmem>>, %arg5: memref<32x128xf32, #tpu.memory_space<vmem>>) attributes {dimension_semantics = [#tpu.dimension_semantics<parallel>, #tpu.dimension_semantics<parallel>, #tpu.dimension_semantics<arbitrary>], iteration_bounds = array<i64: 1, 1, 1>, scalar_prefetch = 0 : i64, scratch_operands = 0 : i64, tpu.core_type = #tpu.core_type<tc>, window_params = [{transform_indices = @transform_0, window_bounds = array<i64: 32, 128>}, {transform_indices = @transform_1, window_bounds = array<i64: 128, 128>}, {transform_indices = @transform_2, window_bounds = array<i64: 32, 128>}]} {
    %c0_i32 = arith.constant 0 : i32
    %0 = arith.cmpi eq, %arg2, %c0_i32 : i32
    %1 = arith.extui %0 : i1 to i32
    %c0_i32_0 = arith.constant 0 : i32
    %2 = arith.cmpi ne, %1, %c0_i32_0 : i32
    scf.if %2 {
      %cst_8 = arith.constant 0.000000e+00 : f32
      %9 = vector.broadcast %cst_8 : f32 to vector<32x128xf32>
      %c0_9 = arith.constant 0 : index
      %c0_10 = arith.constant 0 : index
      %10 = vector.load %arg5[%c0_9, %c0_10] : memref<32x128xf32, #tpu.memory_space<vmem>>, vector<32x128xf32>
      tpu.vector_store %arg5[%c0_9, %c0_10], %9 {strides = array<i32>} : memref<32x128xf32, #tpu.memory_space<vmem>>, vector<32x128xf32>,
    } else {
    }
    %c0 = arith.constant 0 : index
    %c0_1 = arith.constant 0 : index
    %3 = vector.load %arg5[%c0, %c0_1] : memref<32x128xf32, #tpu.memory_space<vmem>>, vector<32x128xf32>
    %c0_2 = arith.constant 0 : index
    %c0_3 = arith.constant 0 : index
    %4 = vector.load %arg3[%c0_2, %c0_3] : memref<32x128xf32, #tpu.memory_space<vmem>>, vector<32x128xf32>
    %c0_4 = arith.constant 0 : index
    %c0_5 = arith.constant 0 : index
    %5 = vector.load %arg4[%c0_4, %c0_5] : memref<128x128xf32, #tpu.memory_space<vmem>>, vector<128x128xf32>
    %cst = arith.constant dense<0.000000e+00> : vector<32x128xf32>
    %6 = tpu.matmul %4, %5, %cst {dimension_numbers = #tpu.dot_dimension_numbers<[1], [0], [0], [1], [0, 0, 1, 1], [], []>} : vector<32x128xf32>, vector<128x128xf32>, vector<32x128xf32> -> vector<32x128xf32>
    %7 = arith.addf %3, %6 : vector<32x128xf32>
    %c0_6 = arith.constant 0 : index
    %c0_7 = arith.constant 0 : index
    %8 = vector.load %arg5[%c0_6, %c0_7] : memref<32x128xf32, #tpu.memory_space<vmem>>, vector<32x128xf32>
    tpu.vector_store %arg5[%c0_6, %c0_7], %7 {strides = array<i32>} : memref<32x128xf32, #tpu.memory_space<vmem>>, vector<32x128xf32>,
    return
  }
  func.func @transform_0(%arg0: i32, %arg1: i32, %arg2: i32) -> (i32, i32) {
    %c0_i32 = arith.constant 0 : i32
    return %arg0, %arg2 : i32, i32
  }
  func.func @transform_1(%arg0: i32, %arg1: i32, %arg2: i32) -> (i32, i32) {
    %c0_i32 = arith.constant 0 : i32
    return %arg2, %arg1 : i32, i32
  }
  func.func @transform_2(%arg0: i32, %arg1: i32, %arg2: i32) -> (i32, i32) {
    %c0_i32 = arith.constant 0 : i32
    return %arg0, %arg1 : i32, i32
  }
}

</mosaic_0001>

<llo_original>
// kernel: tpu_custom_call.1
$region0: #{tpu_custom_call.1}
  #allocation0 [shape = 'u32[]', space=smem, size = 0x4, offset = 0x4, fixed_abs, tag = 'smem constant byte address 0x4 - core index']
  #allocation1 [shape = 'u32[72,128]{1,0:T(1,128)}', space=vmem, size = 0x9000, scoped, tag = 'internal scratch']
  %s0 = inlined_call_operand.hbm [shape: f32[32,128], index: 0, kind: input, shape index: {}]
  %s1 = inlined_call_operand.hbm [shape: f32[128,128], index: 1, kind: input, shape index: {}]
  %s2 = inlined_call_operand.hbm [shape: f32[32,128], index: 2, kind: output, shape index: {}]
  %s3 = sld [smem:[#allocation0]]
  $region30: #{tpu_custom_call.1} parent=0
    _
  %s5 = ssub.s32 1, %s3
  %s6 = scalar_select 0, %s5, %s3
  $region1: #{tpu_custom_call.1} parent=0
    #allocation2 [shape = 'u8[16384]{0}', space=vmem, size = 0x4000, scoped, tag = 'input window, operand 0, single buffered']
    #allocation3 [shape = 's32[1]{0}', space=sflag, size = 0x4, scoped, tag = 'scoped memory for tpu_custom_call.1']
    #allocation4 [shape = 's32[1]{0}', space=sflag, size = 0x4, scoped, tag = 'scoped memory for tpu_custom_call.1']
    #allocation5 [shape = 'u8[65536]{0}', space=vmem, size = 0x10000, scoped, tag = 'input window, operand 1, single buffered']
    #allocation6 [shape = 's32[1]{0}', space=sflag, size = 0x4, scoped, tag = 'scoped memory for tpu_custom_call.1']
    #allocation7 [shape = 'u8[16384]{0}', space=vmem, size = 0x4000, scoped, tag = 'output window, operand 0, single buffered']
    %7 = vsyncpa [#allocation3], 0
    %8 = vsyncpa [#allocation6], 0
    %9 = vsyncpa [#allocation4], 0
    // Predicated region
    $region2: #{tpu_custom_call.1} parent=1 // pred_check
      _
    $region3: #{tpu_custom_call.1} parent=1 // pred_check_branch
      %11 = sbr.rel (0) target = $region5
    $region4: #{tpu_custom_call.1} parent=1 // pred_region
      %13 = vsyncadd [#allocation3], 0
      %s14 = sshll.u32 %s0, 4
      %s15 = int_to_ptr.hbm [resolvable:$true] %s14
      %s16 = sshll.u32 [#allocation2], 4
      %s17 = int_to_ptr.vmem [resolvable:$true] %s16
      %22 = dma.hbm_to_vmem [thread:$0]  %s15, 512, %s17, [#allocation3], 128, 128, 8
    $region5: #{tpu_custom_call.1} parent=1 // pred_fallthru
      _
    // Predicated region
    $region6: #{tpu_custom_call.1} parent=1 // pred_check
      _
    $region7: #{tpu_custom_call.1} parent=1 // pred_check_branch
      %24 = sbr.rel (0) target = $region9
    $region8: #{tpu_custom_call.1} parent=1 // pred_region
      %26 = vsyncadd [#allocation6], 0
      %s27 = sshll.u32 %s1, 4
      %s28 = int_to_ptr.hbm [resolvable:$true] %s27
      %s29 = sshll.u32 [#allocation5], 4
      %s30 = int_to_ptr.vmem [resolvable:$true] %s29
      %35 = dma.hbm_to_vmem [thread:$0]  %s28, 2048, %s30, [#allocation6], 128, 128, 8
    $region9: #{tpu_custom_call.1} parent=1 // pred_fallthru
      _
    // Predicated region
    $region10: #{tpu_custom_call.1} parent=1 // pred_check
      _
    $region11: #{tpu_custom_call.1} parent=1 // pred_check_branch
      %37 = sbr.rel (0) target = $region13
    $region12: #{tpu_custom_call.1} parent=1 // pred_region
      %39 = dma.done [#allocation3], 512
    $region13: #{tpu_custom_call.1} parent=1 // pred_fallthru
      _
    // Predicated region
    $region14: #{tpu_custom_call.1} parent=1 // pred_check
      _
    $region15: #{tpu_custom_call.1} parent=1 // pred_check_branch
      %41 = sbr.rel (0) target = $region17
    $region16: #{tpu_custom_call.1} parent=1 // pred_region
      %43 = dma.done [#allocation6], 2048
    $region17: #{tpu_custom_call.1} parent=1 // pred_fallthru
      _
    %p44 = scmp.eq.s32.totalorder 0, 0
    // Predicated region
    $region18: #{tpu_custom_call.1} parent=1 // pred_check
      %p45 = pneg %p44
    $region19: #{tpu_custom_call.1} parent=1 // pred_check_branch
      %47 = sbr.rel (%p45) target = $region21
    $region20: #{tpu_custom_call.1} parent=1 // pred_region
      %48 = vst [vmem:[#allocation7] sm:$0xff] 0.0
      %49 = vst [vmem:[#allocation7 + $0x8] sm:$0xff] 0.0
      %50 = vst [vmem:[#allocation7 + $0x10] sm:$0xff] 0.0
      %51 = vst [vmem:[#allocation7 + $0x18] sm:$0xff] 0.0
    $region21: #{tpu_custom_call.1} parent=1 // pred_fallthru
      _
    %v52 = vld [vmem:[#allocation7] sm:$0xff]
    %v53 = vld [vmem:[#allocation7 + $0x8] sm:$0xff]
    %v54 = vld [vmem:[#allocation7 + $0x10] sm:$0xff]
    %v55 = vld [vmem:[#allocation7 + $0x18] sm:$0xff]
    %v56 = vld [vmem:[#allocation2] sm:$0xff]
    %v57 = vld [vmem:[#allocation2 + $0x8] sm:$0xff]
    %v58 = vld [vmem:[#allocation2 + $0x10] sm:$0xff]
    %v59 = vld [vmem:[#allocation2 + $0x18] sm:$0xff]
    %v60 = vld [vmem:[#allocation5] sm:$0xff]
    %v61 = vld [vmem:[#allocation5 + $0x8] sm:$0xff]
    %v62 = vld [vmem:[#allocation5 + $0x10] sm:$0xff]
    %v63 = vld [vmem:[#allocation5 + $0x18] sm:$0xff]
    %v64 = vld [vmem:[#allocation5 + $0x20] sm:$0xff]
    %v65 = vld [vmem:[#allocation5 + $0x28] sm:$0xff]
    %v66 = vld [vmem:[#allocation5 + $0x30] sm:$0xff]
    %v67 = vld [vmem:[#allocation5 + $0x38] sm:$0xff]
    %v68 = vld [vmem:[#allocation5 + $0x40] sm:$0xff]
    %v69 = vld [vmem:[#allocation5 + $0x48] sm:$0xff]
    %v70 = vld [vmem:[#allocation5 + $0x50] sm:$0xff]
    %v71 = vld [vmem:[#allocation5 + $0x58] sm:$0xff]
    %v72 = vld [vmem:[#allocation5 + $0x60] sm:$0xff]
    %v73 = vld [vmem:[#allocation5 + $0x68] sm:$0xff]
    %v74 = vld [vmem:[#allocation5 + $0x70] sm:$0xff]
    %v75 = vld [vmem:[#allocation5 + $0x78] sm:$0xff]
    %76 = vmatpush.msra.mxu0 %v75
    %77 = vmatpush.msra.mxu0 %v74
    %78 = vmatpush.msra.mxu0 %v73
    %79 = vmatpush.msra.mxu0 %v72
    %80 = vmatpush.msra.mxu0 %v71
    %81 = vmatpush.msra.mxu0 %v70
    %82 = vmatpush.msra.mxu0 %v69
    %83 = vmatpush.msra.mxu0 %v68
    %84 = vmatpush.msra.mxu0 %v67
    %85 = vmatpush.msra.mxu0 %v66
    %86 = vmatpush.msra.mxu0 %v65
    %87 = vmatpush.msra.mxu0 %v64
    %88 = vmatpush.msra.mxu0 %v63
    %89 = vmatpush.msra.mxu0 %v62
    %90 = vmatpush.msra.mxu0 %v61
    %91 = vmatpush.msra.mxu0 %v60
    %92 = vmatmul.f32.gmra.mxu0 %v56
    %v93 = vpop.f32.mrf.mxu0
    %v94 = vadd.f32 0.0, %v93
    %95 = vmatmul.f32.gmra.mxu0 %v57
    %v96 = vpop.f32.mrf.mxu0
    %v97 = vadd.f32 0.0, %v96
    %98 = vmatmul.f32.gmra.mxu0 %v58
    %v99 = vpop.f32.mrf.mxu0
    %v100 = vadd.f32 0.0, %v99
    %101 = vmatmul.f32.gmra.mxu0 %v59
    %v102 = vpop.f32.mrf.mxu0
    %v103 = vadd.f32 0.0, %v102
    %104 = vdwg.mxu0
    %v105 = vadd.f32 %v52, %v94
    %v106 = vadd.f32 %v53, %v97
    %v107 = vadd.f32 %v54, %v100
    %v108 = vadd.f32 %v55, %v103
    %109 = vst [vmem:[#allocation7] sm:$0xff] %v105
    %110 = vst [vmem:[#allocation7 + $0x8] sm:$0xff] %v106
    %111 = vst [vmem:[#allocation7 + $0x10] sm:$0xff] %v107
    %112 = vst [vmem:[#allocation7 + $0x18] sm:$0xff] %v108
    // Predicated region
    $region22: #{tpu_custom_call.1} parent=1 // pred_check
      _
    $region23: #{tpu_custom_call.1} parent=1 // pred_check_branch
      %114 = sbr.rel (0) target = $region25
    $region24: #{tpu_custom_call.1} parent=1 // pred_region
      %116 = vsyncadd [#allocation4], 0
      %s117 = sshll.u32 [#allocation7], 4
      %s118 = int_to_ptr.vmem [resolvable:$true] %s117
      %s119 = sshll.u32 %s2, 4
      %s120 = int_to_ptr.hbm [resolvable:$true] %s119
      %125 = dma.vmem_to_hbm [thread:$0]  %s118, 512, %s120, [#allocation4], 128, 128, 8
    $region25: #{tpu_custom_call.1} parent=1 // pred_fallthru
      _
    // Predicated region
    $region26: #{tpu_custom_call.1} parent=1 // pred_check
      _
    $region27: #{tpu_custom_call.1} parent=1 // pred_check_branch
      %127 = sbr.rel (0) target = $region29
    $region28: #{tpu_custom_call.1} parent=1 // pred_region
      %129 = dma.done [#allocation4], 512
    $region29: #{tpu_custom_call.1} parent=1 // pred_fallthru
      _
    %130 = vsyncpa [#allocation3], 1
    %131 = vsyncpa [#allocation6], 1
    %132 = vsyncpa [#allocation4], 1

</llo_original>
